<compile_context>
chip_gen: v5e
topology: v5e:2x2
jax: 0.10.0
libtpu: 0.0.40
codegen_flags: <defaults>
</compile_context>

<pallas_src>
import functools

import jax
import jax.numpy as jnp
import numpy as np
from jax.experimental import pallas as pl
from jax.experimental.pallas import tpu as pltpu

PATCH_DIM = 512   # patch_dim
DIM       = 64    # dim (embedding size, LayerNorm width)
ATTN_DIM  = 32    # hidden size of the attention MLP
NUM_CLS   = 1     # num_classes
LN_EPS    = 1e-6


def _round_up(x, m):
    return (x + m - 1) // m * m


def _muti_modal_kernel(x_ref,
                       w_emb_ref, b_emb_ref,
                       w_a1_ref, b_a1_ref,
                       w_a2_ref, b_a2_ref,
                       ln_w_ref, ln_b_ref,
                       w_head_ref, b_head_ref,
                       out_ref,
                       pooled_acc,
                       *, n_rows, tile_n, mm_dtype):
    i = pl.program_id(0)

    # ---- init accumulator on the first tile
    @pl.when(i == 0)
    def _init():
        pooled_acc[...] = jnp.zeros_like(pooled_acc)

    # ---- image embedding: Linear(512->64) + ReLU
    # Cast the x tile in-kernel (hidden under the DMA); f32 MXU accumulation.
    x = x_ref[...].astype(mm_dtype)                                    # (tile_n, 512)
    h = jnp.dot(x, w_emb_ref[...], preferred_element_type=jnp.float32)
    h = jnp.maximum(h + b_emb_ref[...], 0.0)                           # (tile_n, 64) f32
    # TODO(synk): nn.Dropout(p=0.3) is stochastic in train mode; eval-mode identity here.

    # ---- mask rows past N (partial last tile) on h, NOT on x:
    # zeroed rows make a*h == 0 below, so pooled is exact and garbage rows of
    # the partial DMA (possibly Inf/NaN) cannot contaminate the accumulator.
    row = i * tile_n + jax.lax.broadcasted_iota(jnp.int32, (tile_n, 1), 0)
    h = jnp.where(row < n_rows, h, 0.0)                                # (tile_n, 64)

    # ---- attention MLP: Linear(64->32) -> tanh -> Linear(32->1)
    t = jnp.dot(h, w_a1_ref[...], preferred_element_type=jnp.float32) + b_a1_ref[...]
    t = jnp.tanh(t)                                                    # (tile_n, 32)
    # 1-wide "matmul" as a VPU multiply + lane reduce (w_a2 passed as a (1, 32) row)
    a = jnp.sum(t * w_a2_ref[...], axis=-1, keepdims=True) + b_a2_ref[0, 0]  # (tile_n, 1)

    # ---- attention pooling partial sums:  sum_n a_n * h_n
    # Keep 8 sublane-wise partial sums (pure VALU adds); collapse once at the end.
    ah = a * h                                                          # (tile_n, 64)
    pooled_acc[...] += jnp.sum(ah.reshape(tile_n // 8, 8, DIM), axis=0)  # (8, 64)

    # ---- finalize: LayerNorm + head + sigmoid on the last tile
    @pl.when(i == pl.num_programs(0) - 1)
    def _finalize():
        pooled = jnp.sum(pooled_acc[...], axis=0, keepdims=True)       # (1, 64)
        mean = jnp.mean(pooled, axis=-1, keepdims=True)
        ctr = pooled - mean
        var = jnp.mean(ctr * ctr, axis=-1, keepdims=True)
        normed = ctr * jax.lax.rsqrt(var + LN_EPS)
        normed = normed * ln_w_ref[...] + ln_b_ref[...]                # (1, 64)
        # head Linear(64->1) as a lane reduce (w_head passed as a (1, 64) row)
        logit = jnp.sum(normed * w_head_ref[...], axis=-1, keepdims=True) + b_head_ref[0, 0]
        out_ref[...] = jax.nn.sigmoid(logit)


def muti_modal_forward(x, params, tile_n=4096, use_bf16_matmul=True):
    """x: (1, N, PATCH_DIM) float32.  Returns (1, NUM_CLS) float32."""
    n = x.shape[-2]
    x2d = x.reshape(n, PATCH_DIM)                      # squeeze(0): (N, 512)

    # Tile size: multiple of 8 sublanes, capped at the (8-rounded) bag size.
    # 4096 f32 rows = 8 MiB per buffer (16 MiB double-buffered): large enough
    # to amortize the ~0.35 us/step grid overhead, small enough for v7x VMEM.
    tile_n = _round_up(max(8, min(int(tile_n), _round_up(n, 8))), 8)
    grid = (pl.cdiv(n, tile_n),)                       # no wrapper-side pad

    # MXU input dtype for the dominant 512->64 matmul (f32 accumulation either way).
    mm_dtype = jnp.bfloat16 if use_bf16_matmul else jnp.float32
    w_emb = params["w_emb"].astype(mm_dtype)           # tiny (128 KiB), resident

    # Present the 1-wide weights as rows for VPU lane reductions.
    w_a2_row = params["w_a2"].reshape(1, ATTN_DIM)     # (32, 1) -> (1, 32)
    w_head_row = params["w_head"].reshape(1, DIM)      # (64, 1) -> (1, 64)   (NUM_CLS == 1)

    def vmem_const(shape):
        # Grid-invariant weights: constant block index -> stay resident in VMEM.
        return pl.BlockSpec(shape, lambda i: (0, 0))

    smem = pl.BlockSpec(memory_space=pltpu.MemorySpace.SMEM)

    kernel = functools.partial(_muti_modal_kernel, n_rows=n, tile_n=tile_n,
                               mm_dtype=mm_dtype)

    return pl.pallas_call(
        kernel,
        out_shape=jax.ShapeDtypeStruct((1, NUM_CLS), jnp.float32),
        grid=grid,
        in_specs=[
            pl.BlockSpec((tile_n, PATCH_DIM), lambda i: (i, 0)),   # x (f32, tiled over N)
            vmem_const((PATCH_DIM, DIM)),                          # w_emb
            vmem_const((1, DIM)),                                  # b_emb
            vmem_const((DIM, ATTN_DIM)),                           # w_a1
            vmem_const((1, ATTN_DIM)),                             # b_a1
            vmem_const((1, ATTN_DIM)),                             # w_a2 (row)
            smem,                                                  # b_a2 (1, 1) scalar
            vmem_const((1, DIM)),                                  # ln_w
            vmem_const((1, DIM)),                                  # ln_b
            vmem_const((1, DIM)),                                  # w_head (row)
            smem,                                                  # b_head (1, 1) scalar
        ],
        out_specs=pl.BlockSpec((1, NUM_CLS), lambda i: (0, 0)),
        scratch_shapes=[pltpu.VMEM((8, DIM), jnp.float32)],        # sublane-wise pooled acc
        compiler_params=pltpu.CompilerParams(
            dimension_semantics=("arbitrary",),                    # reduction over N
            vmem_limit_bytes=48 * 1024 * 1024,                     # < 64 MiB physical (v7x)
        ),
    )(
        x2d, w_emb, params["b_emb"],
        params["w_a1"], params["b_a1"],
        w_a2_row, params["b_a2"],
        params["ln_w"], params["ln_b"],
        w_head_row, params["b_head"],
    )


def init_params(key):
    ks = jax.random.split(key, 8)

    def lin(k, fan_in, fan_out):
        bound = 1.0 / np.sqrt(fan_in)
        kw, kb = jax.random.split(k)
        w = jax.random.uniform(kw, (fan_in, fan_out), jnp.float32, -bound, bound)
        b = jax.random.uniform(kb, (1, fan_out), jnp.float32, -bound, bound)
        return w, b

    w_emb, b_emb   = lin(ks[0], PATCH_DIM, DIM)
    w_a1, b_a1     = lin(ks[1], DIM, ATTN_DIM)
    w_a2, b_a2     = lin(ks[2], ATTN_DIM, 1)
    w_head, b_head = lin(ks[3], DIM, NUM_CLS)
    ln_w = jnp.ones((1, DIM), jnp.float32)
    ln_b = jnp.zeros((1, DIM), jnp.float32)
    return dict(w_emb=w_emb, b_emb=b_emb, w_a1=w_a1, b_a1=b_a1,
                w_a2=w_a2, b_a2=b_a2, ln_w=ln_w, ln_b=ln_b,
                w_head=w_head, b_head=b_head)


def reference_forward(x, p, use_bf16_matmul=True):
    """Pure-JAX reference (same MXU input dtype on the first matmul as the kernel)."""
    mm_dtype = jnp.bfloat16 if use_bf16_matmul else jnp.float32
    n = x.shape[-2]
    x2d = x.reshape(n, PATCH_DIM)
    h = jnp.dot(x2d.astype(mm_dtype), p["w_emb"].astype(mm_dtype),
                preferred_element_type=jnp.float32) + p["b_emb"]
    h = jnp.maximum(h, 0.0)
    a = jnp.tanh(h @ p["w_a1"] + p["b_a1"]) @ p["w_a2"] + p["b_a2"]
    pooled = a.T @ h
    mean = pooled.mean(-1, keepdims=True)
    var = ((pooled - mean) ** 2).mean(-1, keepdims=True)
    normed = (pooled - mean) / jnp.sqrt(var + LN_EPS) * p["ln_w"] + p["ln_b"]
    return jax.nn.sigmoid(normed @ p["w_head"] + p["b_head"])


if __name__ == "__main__":
    key = jax.random.PRNGKey(0)
    k_x, k_p = jax.random.split(key)

    # Small bag; N deliberately NOT a multiple of 8 or of the tile so both the
    # multi-step accumulation and the masked partial-tile path are exercised.
    N = 50
    x = jax.random.normal(k_x, (1, N, PATCH_DIM), dtype=jnp.float32)
    params = init_params(k_p)

    ref = jax.block_until_ready(reference_forward(x, params))

    # 1) small tiles: 4 grid steps, accumulator init/finalize + masked last tile
    out_small = jax.block_until_ready(muti_modal_forward(x, params, tile_n=16))
    # 2) default tiles: tile clamps to 56, single (partial) block
    out_default = jax.block_until_ready(muti_modal_forward(x, params))

    for name, out in (("tile_n=16", out_small), ("tile_n=default", out_default)):
        if not np.allclose(np.asarray(out), np.asarray(ref), rtol=1e-4, atol=1e-4):
            raise AssertionError(
                f"Pallas kernel mismatch vs JAX reference ({name}): "
                f"{np.asarray(out)} vs {np.asarray(ref)}")

    print("KERNEL_OK")
</pallas_src>

<mosaic_0001>
module attributes {stable_mosaic.version = 11 : i64} {
  func.func @_muti_modal_kernel(%arg0: i32, %arg1: memref<16x512xf32, #tpu.memory_space<vmem>>, %arg2: memref<512x64xbf16, #tpu.memory_space<vmem>>, %arg3: memref<1x64xf32, #tpu.memory_space<vmem>>, %arg4: memref<64x32xf32, #tpu.memory_space<vmem>>, %arg5: memref<1x32xf32, #tpu.memory_space<vmem>>, %arg6: memref<1x32xf32, #tpu.memory_space<vmem>>, %arg7: memref<1x1xf32, #tpu.memory_space<smem>>, %arg8: memref<1x64xf32, #tpu.memory_space<vmem>>, %arg9: memref<1x64xf32, #tpu.memory_space<vmem>>, %arg10: memref<1x64xf32, #tpu.memory_space<vmem>>, %arg11: memref<1x1xf32, #tpu.memory_space<smem>>, %arg12: memref<1x1xf32, #tpu.memory_space<vmem>>, %arg13: memref<8x64xf32, #tpu.memory_space<vmem>>) attributes {dimension_semantics = [#tpu.dimension_semantics<arbitrary>], iteration_bounds = array<i64: 4>, scalar_prefetch = 0 : i64, scratch_operands = 1 : i64, tpu.core_type = #tpu.core_type<tc>, window_params = [{transform_indices = @transform_0, window_bounds = array<i64: 16, 512>}, {pipeline_mode = #tpu.pipeline_mode<synchronous>, transform_indices = @transform_1, window_bounds = array<i64: 512, 64>}, {pipeline_mode = #tpu.pipeline_mode<synchronous>, transform_indices = @transform_2, window_bounds = array<i64: 1, 64>}, {pipeline_mode = #tpu.pipeline_mode<synchronous>, transform_indices = @transform_3, window_bounds = array<i64: 64, 32>}, {pipeline_mode = #tpu.pipeline_mode<synchronous>, transform_indices = @transform_4, window_bounds = array<i64: 1, 32>}, {pipeline_mode = #tpu.pipeline_mode<synchronous>, transform_indices = @transform_5, window_bounds = array<i64: 1, 32>}, {transform_indices = @transform_6, window_bounds = array<i64: 1, 1>}, {pipeline_mode = #tpu.pipeline_mode<synchronous>, transform_indices = @transform_7, window_bounds = array<i64: 1, 64>}, {pipeline_mode = #tpu.pipeline_mode<synchronous>, transform_indices = @transform_8, window_bounds = array<i64: 1, 64>}, {pipeline_mode = #tpu.pipeline_mode<synchronous>, transform_indices = @transform_9, window_bounds = array<i64: 1, 64>}, {transform_indices = @transform_10, window_bounds = array<i64: 1, 1>}, {pipeline_mode = #tpu.pipeline_mode<synchronous>, transform_indices = @transform_11, window_bounds = array<i64: 1, 1>}]} {
    %c0_i32 = arith.constant 0 : i32
    %0 = arith.cmpi eq, %arg0, %c0_i32 : i32
    %1 = arith.extui %0 : i1 to i32
    %c0_i32_0 = arith.constant 0 : i32
    %2 = arith.cmpi ne, %1, %c0_i32_0 : i32
    scf.if %2 {
      %cst_24 = arith.constant 0.000000e+00 : f32
      %46 = vector.broadcast %cst_24 : f32 to vector<8x64xf32>
      %c0_25 = arith.constant 0 : index
      %c0_26 = arith.constant 0 : index
      %47 = vector.load %arg13[%c0_25, %c0_26] : memref<8x64xf32, #tpu.memory_space<vmem>>, vector<8x64xf32>
      tpu.vector_store %arg13[%c0_25, %c0_26], %46 {strides = array<i32>} : memref<8x64xf32, #tpu.memory_space<vmem>>, vector<8x64xf32>,
    } else {
    }
    %c0 = arith.constant 0 : index
    %c0_1 = arith.constant 0 : index
    %3 = vector.load %arg1[%c0, %c0_1] : memref<16x512xf32, #tpu.memory_space<vmem>>, vector<16x512xf32>
    %4 = arith.truncf %3 : vector<16x512xf32> to vector<16x512xbf16>
    %c0_2 = arith.constant 0 : index
    %c0_3 = arith.constant 0 : index
    %5 = vector.load %arg2[%c0_2, %c0_3] : memref<512x64xbf16, #tpu.memory_space<vmem>>, vector<512x64xbf16>
    %cst = arith.constant dense<0.000000e+00> : vector<16x64xf32>
    %6 = tpu.matmul %4, %5, %cst {dimension_numbers = #tpu.dot_dimension_numbers<[1], [0], [0], [1], [0, 0, 1, 1], [], []>} : vector<16x512xbf16>, vector<512x64xbf16>, vector<16x64xf32> -> vector<16x64xf32>
    %c0_4 = arith.constant 0 : index
    %c0_5 = arith.constant 0 : index
    %7 = vector.load %arg3[%c0_4, %c0_5] : memref<1x64xf32, #tpu.memory_space<vmem>>, vector<1x64xf32>
    %8 = vector.broadcast %7 : vector<1x64xf32> to vector<16x64xf32>
    %9 = arith.addf %6, %8 : vector<16x64xf32>
    %cst_6 = arith.constant 0.000000e+00 : f32
    %10 = vector.broadcast %cst_6 : f32 to vector<16x64xf32>
    %11 = arith.maximumf %9, %10 : vector<16x64xf32>
    %c16_i32 = arith.constant 16 : i32
    %12 = arith.muli %arg0, %c16_i32 : i32
    %13 = tpu.iota {dimensions = array<i32: 0>} : vector<16x1xi32>
    %14 = vector.broadcast %12 : i32 to vector<16x1xi32>
    %15 = arith.addi %14, %13 : vector<16x1xi32>
    %c50_i32 = arith.constant 50 : i32
    %16 = vector.broadcast %c50_i32 : i32 to vector<16x1xi32>
    %17 = arith.cmpi slt, %15, %16 : vector<16x1xi32>
    %cst_7 = arith.constant 0.000000e+00 : f32
    %18 = vector.shape_cast %17 : vector<16x1xi1> to vector<16x1xi1>
    %19 = vector.broadcast %18 : vector<16x1xi1> to vector<16x64xi1>
    %20 = vector.broadcast %cst_7 : f32 to vector<16x64xf32>
    %21 = arith.select %19, %11, %20 : vector<16x64xi1>, vector<16x64xf32>
    %c0_8 = arith.constant 0 : index
    %c0_9 = arith.constant 0 : index
    %22 = vector.load %arg4[%c0_8, %c0_9] : memref<64x32xf32, #tpu.memory_space<vmem>>, vector<64x32xf32>
    %cst_10 = arith.constant dense<0.000000e+00> : vector<16x32xf32>
    %23 = tpu.matmul %21, %22, %cst_10 {dimension_numbers = #tpu.dot_dimension_numbers<[1], [0], [0], [1], [0, 0, 1, 1], [], []>} : vector<16x64xf32>, vector<64x32xf32>, vector<16x32xf32> -> vector<16x32xf32>
    %c0_11 = arith.constant 0 : index
    %c0_12 = arith.constant 0 : index
    %24 = vector.load %arg5[%c0_11, %c0_12] : memref<1x32xf32, #tpu.memory_space<vmem>>, vector<1x32xf32>
    %25 = vector.broadcast %24 : vector<1x32xf32> to vector<16x32xf32>
    %26 = arith.addf %23, %25 : vector<16x32xf32>
    %27 = math.tanh %26 : vector<16x32xf32>
    %c0_13 = arith.constant 0 : index
    %c0_14 = arith.constant 0 : index
    %28 = vector.load %arg6[%c0_13, %c0_14] : memref<1x32xf32, #tpu.memory_space<vmem>>, vector<1x32xf32>
    %29 = vector.broadcast %28 : vector<1x32xf32> to vector<16x32xf32>
    %30 = arith.mulf %27, %29 : vector<16x32xf32>
    %cst_15 = arith.constant dense<0.000000e+00> : vector<16xf32>
    %31 = vector.multi_reduction <add>, %30, %cst_15 [1] : vector<16x32xf32> to vector<16xf32>
    %32 = vector.shape_cast %31 : vector<16xf32> to vector<16x1xf32>
    %c0_16 = arith.constant 0 : index
    %c0_17 = arith.constant 0 : index
    %33 = memref.load %arg7[%c0_16, %c0_17] : memref<1x1xf32, #tpu.memory_space<smem>>
    %34 = vector.broadcast %33 : f32 to vector<16x1xf32>
    %35 = arith.addf %32, %34 : vector<16x1xf32>
    %36 = vector.broadcast %35 : vector<16x1xf32> to vector<16x64xf32>
    %37 = arith.mulf %36, %21 : vector<16x64xf32>
    %c0_18 = arith.constant 0 : index
    %c0_19 = arith.constant 0 : index
    %38 = vector.load %arg13[%c0_18, %c0_19] : memref<8x64xf32, #tpu.memory_space<vmem>>, vector<8x64xf32>
    %39 = vector.shape_cast %37 : vector<16x64xf32> to vector<2x8x64xf32>
    %cst_20 = arith.constant dense<0.000000e+00> : vector<8x64xf32>
    %40 = vector.multi_reduction <add>, %39, %cst_20 [0] : vector<2x8x64xf32> to vector<8x64xf32>
    %41 = arith.addf %38, %40 : vector<8x64xf32>
    %c0_21 = arith.constant 0 : index
    %c0_22 = arith.constant 0 : index
    %42 = vector.load %arg13[%c0_21, %c0_22] : memref<8x64xf32, #tpu.memory_space<vmem>>, vector<8x64xf32>
    tpu.vector_store %arg13[%c0_21, %c0_22], %41 {strides = array<i32>} : memref<8x64xf32, #tpu.memory_space<vmem>>, vector<8x64xf32>,
    %c3_i32 = arith.constant 3 : i32
    %43 = arith.cmpi eq, %arg0, %c3_i32 : i32
    %44 = arith.extui %43 : i1 to i32
    %c0_i32_23 = arith.constant 0 : i32
    %45 = arith.cmpi ne, %44, %c0_i32_23 : i32
    scf.if %45 {
      %c0_24 = arith.constant 0 : index
      %c0_25 = arith.constant 0 : index
      %46 = vector.load %arg13[%c0_24, %c0_25] : memref<8x64xf32, #tpu.memory_space<vmem>>, vector<8x64xf32>
      %cst_26 = arith.constant dense<0.000000e+00> : vector<64xf32>
      %47 = vector.multi_reduction <add>, %46, %cst_26 [0] : vector<8x64xf32> to vector<64xf32>
      %48 = vector.shape_cast %47 : vector<64xf32> to vector<1x64xf32>
      %cst_27 = arith.constant dense<0.000000e+00> : vector<1xf32>
      %49 = vector.multi_reduction <add>, %48, %cst_27 [1] : vector<1x64xf32> to vector<1xf32>
      %50 = vector.shape_cast %49 : vector<1xf32> to vector<1x1xf32>
      %cst_28 = arith.constant 6.400000e+01 : f32
      %51 = vector.broadcast %cst_28 : f32 to vector<1x1xf32>
      %52 = arith.divf %50, %51 : vector<1x1xf32>
      %53 = vector.broadcast %52 : vector<1x1xf32> to vector<1x64xf32>
      %54 = arith.subf %48, %53 : vector<1x64xf32>
      %55 = arith.mulf %54, %54 : vector<1x64xf32>
      %cst_29 = arith.constant dense<0.000000e+00> : vector<1xf32>
      %56 = vector.multi_reduction <add>, %55, %cst_29 [1] : vector<1x64xf32> to vector<1xf32>
      %57 = vector.shape_cast %56 : vector<1xf32> to vector<1x1xf32>
      %cst_30 = arith.constant 6.400000e+01 : f32
      %58 = vector.broadcast %cst_30 : f32 to vector<1x1xf32>
      %59 = arith.divf %57, %58 : vector<1x1xf32>
      %cst_31 = arith.constant 9.99999997E-7 : f32
      %60 = vector.broadcast %cst_31 : f32 to vector<1x1xf32>
      %61 = arith.addf %59, %60 : vector<1x1xf32>
      %62 = math.rsqrt %61 : vector<1x1xf32>
      %63 = vector.broadcast %62 : vector<1x1xf32> to vector<1x64xf32>
      %64 = arith.mulf %54, %63 : vector<1x64xf32>
      %c0_32 = arith.constant 0 : index
      %c0_33 = arith.constant 0 : index
      %65 = vector.load %arg8[%c0_32, %c0_33] : memref<1x64xf32, #tpu.memory_space<vmem>>, vector<1x64xf32>
      %66 = arith.mulf %64, %65 : vector<1x64xf32>
      %c0_34 = arith.constant 0 : index
      %c0_35 = arith.constant 0 : index
      %67 = vector.load %arg9[%c0_34, %c0_35] : memref<1x64xf32, #tpu.memory_space<vmem>>, vector<1x64xf32>
      %68 = arith.addf %66, %67 : vector<1x64xf32>
      %c0_36 = arith.constant 0 : index
      %c0_37 = arith.constant 0 : index
      %69 = vector.load %arg10[%c0_36, %c0_37] : memref<1x64xf32, #tpu.memory_space<vmem>>, vector<1x64xf32>
      %70 = arith.mulf %68, %69 : vector<1x64xf32>
      %cst_38 = arith.constant dense<0.000000e+00> : vector<1xf32>
      %71 = vector.multi_reduction <add>, %70, %cst_38 [1] : vector<1x64xf32> to vector<1xf32>
      %72 = vector.shape_cast %71 : vector<1xf32> to vector<1x1xf32>
      %c0_39 = arith.constant 0 : index
      %c0_40 = arith.constant 0 : index
      %73 = memref.load %arg11[%c0_39, %c0_40] : memref<1x1xf32, #tpu.memory_space<smem>>
      %74 = vector.broadcast %73 : f32 to vector<1x1xf32>
      %75 = arith.addf %72, %74 : vector<1x1xf32>
      %76 = arith.negf %75 : vector<1x1xf32>
      %77 = math.exp %76 : vector<1x1xf32>
      %cst_41 = arith.constant 1.000000e+00 : f32
      %78 = vector.broadcast %cst_41 : f32 to vector<1x1xf32>
      %79 = arith.addf %78, %77 : vector<1x1xf32>
      %80 = arith.divf %78, %79 : vector<1x1xf32>
      %c0_42 = arith.constant 0 : index
      %c0_43 = arith.constant 0 : index
      %81 = vector.load %arg12[%c0_42, %c0_43] : memref<1x1xf32, #tpu.memory_space<vmem>>, vector<1x1xf32>
      tpu.vector_store %arg12[%c0_42, %c0_43], %80 {strides = array<i32>} : memref<1x1xf32, #tpu.memory_space<vmem>>, vector<1x1xf32>,
    } else {
    }
    return
  }
  func.func @transform_0(%arg0: i32) -> (i32, i32) {
    %c0_i32 = arith.constant 0 : i32
    %c0_i32_0 = arith.constant 0 : i32
    return %arg0, %c0_i32 : i32, i32
  }
  func.func @transform_1(%arg0: i32) -> (i32, i32) {
    %c0_i32 = arith.constant 0 : i32
    %c0_i32_0 = arith.constant 0 : i32
    %c0_i32_1 = arith.constant 0 : i32
    return %c0_i32, %c0_i32_0 : i32, i32
  }
  func.func @transform_2(%arg0: i32) -> (i32, i32) {
    %c0_i32 = arith.constant 0 : i32
    %c0_i32_0 = arith.constant 0 : i32
    %c0_i32_1 = arith.constant 0 : i32
    return %c0_i32, %c0_i32_0 : i32, i32
  }
  func.func @transform_3(%arg0: i32) -> (i32, i32) {
    %c0_i32 = arith.constant 0 : i32
    %c0_i32_0 = arith.constant 0 : i32
    %c0_i32_1 = arith.constant 0 : i32
    return %c0_i32, %c0_i32_0 : i32, i32
  }
  func.func @transform_4(%arg0: i32) -> (i32, i32) {
    %c0_i32 = arith.constant 0 : i32
    %c0_i32_0 = arith.constant 0 : i32
    %c0_i32_1 = arith.constant 0 : i32
    return %c0_i32, %c0_i32_0 : i32, i32
  }
  func.func @transform_5(%arg0: i32) -> (i32, i32) {
    %c0_i32 = arith.constant 0 : i32
    %c0_i32_0 = arith.constant 0 : i32
    %c0_i32_1 = arith.constant 0 : i32
    return %c0_i32, %c0_i32_0 : i32, i32
  }
  func.func @transform_6(%arg0: i32) -> (i32, i32) {
    %c0_i32 = arith.constant 0 : i32
    %c0_i32_0 = arith.constant 0 : i32
    %c0_i32_1 = arith.constant 0 : i32
    return %c0_i32, %c0_i32_0 : i32, i32
  }
  func.func @transform_7(%arg0: i32) -> (i32, i32) {
    %c0_i32 = arith.constant 0 : i32
    %c0_i32_0 = arith.constant 0 : i32
    %c0_i32_1 = arith.constant 0 : i32
    return %c0_i32, %c0_i32_0 : i32, i32
  }
  func.func @transform_8(%arg0: i32) -> (i32, i32) {
    %c0_i32 = arith.constant 0 : i32
    %c0_i32_0 = arith.constant 0 : i32
    %c0_i32_1 = arith.constant 0 : i32
    return %c0_i32, %c0_i32_0 : i32, i32
  }
  func.func @transform_9(%arg0: i32) -> (i32, i32) {
    %c0_i32 = arith.constant 0 : i32
    %c0_i32_0 = arith.constant 0 : i32
    %c0_i32_1 = arith.constant 0 : i32
    return %c0_i32, %c0_i32_0 : i32, i32
  }
  func.func @transform_10(%arg0: i32) -> (i32, i32) {
    %c0_i32 = arith.constant 0 : i32
    %c0_i32_0 = arith.constant 0 : i32
    %c0_i32_1 = arith.constant 0 : i32
    return %c0_i32, %c0_i32_0 : i32, i32
  }
  func.func @transform_11(%arg0: i32) -> (i32, i32) {
    %c0_i32 = arith.constant 0 : i32
    %c0_i32_0 = arith.constant 0 : i32
    %c0_i32_1 = arith.constant 0 : i32
    return %c0_i32, %c0_i32_0 : i32, i32
  }
}

</mosaic_0001>

<llo_original>
// kernel: tpu_custom_call.1
$region0: #{tpu_custom_call.1}
  #allocation0 [shape = 'u32[]', space=smem, size = 0x4, offset = 0x4, fixed_abs, tag = 'smem constant byte address 0x4 - core index']
  #allocation1 [shape = 'u32[72,128]{1,0:T(1,128)}', space=vmem, size = 0x9000, scoped, tag = 'internal scratch']
  #allocation2 [shape = 'f32[8,64]{1,0:T(8,128)}', space=vmem, size = 0x1000, scoped, tag = 'scratch operand']
  #allocation3 [shape = 'f32[1,1]{1,0:T(1,128)S(6)}', space=smem, size = 0x200, scoped, tag = 'scoped memory for tpu_custom_call.1']
  #allocation4 [shape = 'f32[1,1]{1,0:T(1,128)S(6)}', space=smem, size = 0x200, scoped, tag = 'scoped memory for tpu_custom_call.1']
  %s0 = inlined_call_operand.vmem [shape: f32[50,512], index: 0, kind: input, shape index: {}]
  %s1 = inlined_call_operand.vmem [shape: bf16[512,64], index: 1, kind: input, shape index: {}]
  %s2 = inlined_call_operand.vmem [shape: f32[1,64], index: 2, kind: input, shape index: {}]
  %s3 = inlined_call_operand.vmem [shape: f32[64,32], index: 3, kind: input, shape index: {}]
  %s4 = inlined_call_operand.vmem [shape: f32[1,32], index: 4, kind: input, shape index: {}]
  %s5 = inlined_call_operand.vmem [shape: f32[1,32], index: 5, kind: input, shape index: {}]
  %s6 = inlined_call_operand.<no memory space> [shape: f32[1,1], index: 6, kind: input, shape index: {}]
  %s7 = inlined_call_operand.vmem [shape: f32[1,64], index: 7, kind: input, shape index: {}]
  %s8 = inlined_call_operand.vmem [shape: f32[1,64], index: 8, kind: input, shape index: {}]
  %s9 = inlined_call_operand.vmem [shape: f32[1,64], index: 9, kind: input, shape index: {}]
  %s10 = inlined_call_operand.<no memory space> [shape: f32[1,1], index: 10, kind: input, shape index: {}]
  %s11 = inlined_call_operand.hbm [shape: f32[1,1], index: 11, kind: output, shape index: {}]
  %s12 = sld [smem:[#allocation0]]
  $region85: #{tpu_custom_call.1} parent=0
    _
  %s14 = ssub.s32 1, %s12
  %s15 = scalar_select 0, %s14, %s12
  %16 = sst [smem:[#allocation3]] %s6
  %17 = sst [smem:[#allocation4]] %s10
  $region1: #{tpu_custom_call.1} parent=0
    #allocation5 [shape = 'u8[512]{0}', space=vmem, size = 0x400, scoped, tag = 'output window, operand 0, single buffered']
    #allocation6 [shape = 's32[2]{0}', space=sflag, size = 0x8, scoped, tag = 'scoped memory for tpu_custom_call.1']
    %18 = vsyncpa [#allocation6], 0
    loop: start=0, step=1, limit=6
    $region2: #{tpu_custom_call.1} parent=1 // loop_pre_header
      _
    $region3: #{tpu_custom_call.1} parent=1 // loop_header
      %s20 = sphi 0, %s24
      %p21 = scmp.ge.s32.totalorder %s20, 6
      %s30 = sphi 0, %s32
      %s33 = sphi 0, %s30
      %s34 = sphi 0, %s33
      %s50 = sphi 0, %s34
      %s54 = sphi 0, %s54
      %s56 = sphi 0, %s54
      %s57 = sphi 0, %s56
      %s71 = sphi 0, %s57
      %s75 = sphi 0, %s75
      %s77 = sphi 0, %s75
      %s78 = sphi 0, %s77
      %s92 = sphi 0, %s78
      %s96 = sphi 0, %s96
      %s98 = sphi 0, %s96
      %s99 = sphi 0, %s98
      %s113 = sphi 0, %s99
      %s117 = sphi 0, %s117
      %s119 = sphi 0, %s117
      %s120 = sphi 0, %s119
      %s134 = sphi 0, %s120
      %s138 = sphi 0, %s138
      %s140 = sphi 0, %s138
      %s141 = sphi 0, %s140
      %s155 = sphi 0, %s141
      %s159 = sphi 0, %s159
      %s161 = sphi 0, %s159
      %s162 = sphi 0, %s161
      %s176 = sphi 0, %s162
      %s180 = sphi 0, %s180
      %s182 = sphi 0, %s180
      %s183 = sphi 0, %s182
      %s197 = sphi 0, %s183
      %s201 = sphi 0, %s201
      %s203 = sphi 0, %s201
      %s204 = sphi 0, %s203
      %s218 = sphi 0, %s204
      %s222 = sphi 0, %s222
      %s224 = sphi 0, %s222
      %s225 = sphi 0, %s224
      %s239 = sphi 0, %s225
      %s243 = sphi 0, %s243
      %s245 = sphi 0, %s243
      %s246 = sphi 0, %s245
      %s260 = sphi 0, %s246
      %s264 = sphi 0, %s264
      %s266 = sphi 0, %s264
      %s267 = sphi 0, %s266
      %s281 = sphi 0, %s267
    $region4: #{tpu_custom_call.1} parent=1 // loop_header_branch
      %23 = sbr.rel (%p21) target = $region8
    $region5: #{tpu_custom_call.1} parent=1 // loop_body
      %s25 = ssub.s32 %s20, 1
      %s26 = ssub.s32 %s20, 2
      %s27 = sadd.s32 %s20, 1
      %s28 = ssub.s32 %s20, %s27
      %p29 = scmp.eq.s32.totalorder %s28, 0
      %s31 = sadd.s32 %s30, 1
      %s32 = scalar_select %p29, %s30, %s31
      %p35 = pneg %p29
      %p36 = scmp.eq.s32.totalorder %s20, 3
      %p37 = por %p35, %p36
      %p38 = scmp.ne.s32.totalorder %s30, %s33
      %p39 = scmp.eq.s32.totalorder %s20, 0
      %p40 = por %p38, %p39
      %p41 = scmp.ne.s32.totalorder %s30, %s33
      %p42 = scmp.eq.s32.totalorder %s25, 3
      %p43 = por %p41, %p42
      %p44 = scmp.ne.s32.totalorder %s33, %s34
      %p45 = scmp.eq.s32.totalorder %s25, 0
      %p46 = por %p44, %p45
      %p47 = scmp.ne.s32.totalorder %s33, %s34
      %p48 = scmp.eq.s32.totalorder %s26, 3
      %p49 = por %p47, %p48
      %p51 = scmp.ne.s32.totalorder %s34, %s50
      %p52 = scmp.eq.s32.totalorder %s26, 0
      %p53 = por %p51, %p52
      %s55 = sadd.s32 %s54, 1
      %p58 = scmp.eq.s32.totalorder %s20, 3
      %p59 = scmp.ne.s32.totalorder %s54, %s56
      %p60 = scmp.eq.s32.totalorder %s20, 0
      %p61 = por %p59, %p60
      %p62 = scmp.ne.s32.totalorder %s54, %s56
      %p63 = scmp.eq.s32.totalorder %s25, 3
      %p64 = por %p62, %p63
      %p65 = scmp.ne.s32.totalorder %s56, %s57
      %p66 = scmp.eq.s32.totalorder %s25, 0
      %p67 = por %p65, %p66
      %p68 = scmp.ne.s32.totalorder %s56, %s57
      %p69 = scmp.eq.s32.totalorder %s26, 3
      %p70 = por %p68, %p69
      %p72 = scmp.ne.s32.totalorder %s57, %s71
      %p73 = scmp.eq.s32.totalorder %s26, 0
      %p74 = por %p72, %p73
      %s76 = sadd.s32 %s75, 1
      %p79 = scmp.eq.s32.totalorder %s20, 3
      %p80 = scmp.ne.s32.totalorder %s75, %s77
      %p81 = scmp.eq.s32.totalorder %s20, 0
      %p82 = por %p80, %p81
      %p83 = scmp.ne.s32.totalorder %s75, %s77
      %p84 = scmp.eq.s32.totalorder %s25, 3
      %p85 = por %p83, %p84
      %p86 = scmp.ne.s32.totalorder %s77, %s78
      %p87 = scmp.eq.s32.totalorder %s25, 0
      %p88 = por %p86, %p87
      %p89 = scmp.ne.s32.totalorder %s77, %s78
      %p90 = scmp.eq.s32.totalorder %s26, 3
      %p91 = por %p89, %p90
      %p93 = scmp.ne.s32.totalorder %s78, %s92
      %p94 = scmp.eq.s32.totalorder %s26, 0
      %p95 = por %p93, %p94
      %s97 = sadd.s32 %s96, 1
      %p100 = scmp.eq.s32.totalorder %s20, 3
      %p101 = scmp.ne.s32.totalorder %s96, %s98
      %p102 = scmp.eq.s32.totalorder %s20, 0
      %p103 = por %p101, %p102
      %p104 = scmp.ne.s32.totalorder %s96, %s98
      %p105 = scmp.eq.s32.totalorder %s25, 3
      %p106 = por %p104, %p105
      %p107 = scmp.ne.s32.totalorder %s98, %s99
      %p108 = scmp.eq.s32.totalorder %s25, 0
      %p109 = por %p107, %p108
      %p110 = scmp.ne.s32.totalorder %s98, %s99
      %p111 = scmp.eq.s32.totalorder %s26, 3
      %p112 = por %p110, %p111
      %p114 = scmp.ne.s32.totalorder %s99, %s113
      %p115 = scmp.eq.s32.totalorder %s26, 0
      %p116 = por %p114, %p115
      %s118 = sadd.s32 %s117, 1
      %p121 = scmp.eq.s32.totalorder %s20, 3
      %p122 = scmp.ne.s32.totalorder %s117, %s119
      %p123 = scmp.eq.s32.totalorder %s20, 0
      %p124 = por %p122, %p123
      %p125 = scmp.ne.s32.totalorder %s117, %s119
      %p126 = scmp.eq.s32.totalorder %s25, 3
      %p127 = por %p125, %p126
      %p128 = scmp.ne.s32.totalorder %s119, %s120
      %p129 = scmp.eq.s32.totalorder %s25, 0
      %p130 = por %p128, %p129
      %p131 = scmp.ne.s32.totalorder %s119, %s120
      %p132 = scmp.eq.s32.totalorder %s26, 3
      %p133 = por %p131, %p132
      %p135 = scmp.ne.s32.totalorder %s120, %s134
      %p136 = scmp.eq.s32.totalorder %s26, 0
      %p137 = por %p135, %p136
      %s139 = sadd.s32 %s138, 1
      %p142 = scmp.eq.s32.totalorder %s20, 3
      %p143 = scmp.ne.s32.totalorder %s138, %s140
      %p144 = scmp.eq.s32.totalorder %s20, 0
      %p145 = por %p143, %p144
      %p146 = scmp.ne.s32.totalorder %s138, %s140
      %p147 = scmp.eq.s32.totalorder %s25, 3
      %p148 = por %p146, %p147
      %p149 = scmp.ne.s32.totalorder %s140, %s141
      %p150 = scmp.eq.s32.totalorder %s25, 0
      %p151 = por %p149, %p150
      %p152 = scmp.ne.s32.totalorder %s140, %s141
      %p153 = scmp.eq.s32.totalorder %s26, 3
      %p154 = por %p152, %p153
      %p156 = scmp.ne.s32.totalorder %s141, %s155
      %p157 = scmp.eq.s32.totalorder %s26, 0
      %p158 = por %p156, %p157
      %s160 = sadd.s32 %s159, 1
      %p163 = scmp.eq.s32.totalorder %s20, 3
      %p164 = scmp.ne.s32.totalorder %s159, %s161
      %p165 = scmp.eq.s32.totalorder %s20, 0
      %p166 = por %p164, %p165
      %p167 = scmp.ne.s32.totalorder %s159, %s161
      %p168 = scmp.eq.s32.totalorder %s25, 3
      %p169 = por %p167, %p168
      %p170 = scmp.ne.s32.totalorder %s161, %s162
      %p171 = scmp.eq.s32.totalorder %s25, 0
      %p172 = por %p170, %p171
      %p173 = scmp.ne.s32.totalorder %s161, %s162
      %p174 = scmp.eq.s32.totalorder %s26, 3
      %p175 = por %p173, %p174
      %p177 = scmp.ne.s32.totalorder %s162, %s176
      %p178 = scmp.eq.s32.totalorder %s26, 0
      %p179 = por %p177, %p178
      %s181 = sadd.s32 %s180, 1
      %p184 = scmp.eq.s32.totalorder %s20, 3
      %p185 = scmp.ne.s32.totalorder %s180, %s182
      %p186 = scmp.eq.s32.totalorder %s20, 0
      %p187 = por %p185, %p186
      %p188 = scmp.ne.s32.totalorder %s180, %s182
      %p189 = scmp.eq.s32.totalorder %s25, 3
      %p190 = por %p188, %p189
      %p191 = scmp.ne.s32.totalorder %s182, %s183
      %p192 = scmp.eq.s32.totalorder %s25, 0
      %p193 = por %p191, %p192
      %p194 = scmp.ne.s32.totalorder %s182, %s183
      %p195 = scmp.eq.s32.totalorder %s26, 3
      %p196 = por %p194, %p195
      %p198 = scmp.ne.s32.totalorder %s183, %s197
      %p199 = scmp.eq.s32.totalorder %s26, 0
      %p200 = por %p198, %p199
      %s202 = sadd.s32 %s201, 1
      %p205 = scmp.eq.s32.totalorder %s20, 3
      %p206 = scmp.ne.s32.totalorder %s201, %s203
      %p207 = scmp.eq.s32.totalorder %s20, 0
      %p208 = por %p206, %p207
      %p209 = scmp.ne.s32.totalorder %s201, %s203
      %p210 = scmp.eq.s32.totalorder %s25, 3
      %p211 = por %p209, %p210
      %p212 = scmp.ne.s32.totalorder %s203, %s204
      %p213 = scmp.eq.s32.totalorder %s25, 0
      %p214 = por %p212, %p213
      %p215 = scmp.ne.s32.totalorder %s203, %s204
      %p216 = scmp.eq.s32.totalorder %s26, 3
      %p217 = por %p215, %p216
      %p219 = scmp.ne.s32.totalorder %s204, %s218
      %p220 = scmp.eq.s32.totalorder %s26, 0
      %p221 = por %p219, %p220
      %s223 = sadd.s32 %s222, 1
      %p226 = scmp.eq.s32.totalorder %s20, 3
      %p227 = scmp.ne.s32.totalorder %s222, %s224
      %p228 = scmp.eq.s32.totalorder %s20, 0
      %p229 = por %p227, %p228
      %p230 = scmp.ne.s32.totalorder %s222, %s224
      %p231 = scmp.eq.s32.totalorder %s25, 3
      %p232 = por %p230, %p231
      %p233 = scmp.ne.s32.totalorder %s224, %s225
      %p234 = scmp.eq.s32.totalorder %s25, 0
      %p235 = por %p233, %p234
      %p236 = scmp.ne.s32.totalorder %s224, %s225
      %p237 = scmp.eq.s32.totalorder %s26, 3
      %p238 = por %p236, %p237
      %p240 = scmp.ne.s32.totalorder %s225, %s239
      %p241 = scmp.eq.s32.totalorder %s26, 0
      %p242 = por %p240, %p241
      %s244 = sadd.s32 %s243, 1
      %p247 = scmp.eq.s32.totalorder %s20, 3
      %p248 = scmp.ne.s32.totalorder %s243, %s245
      %p249 = scmp.eq.s32.totalorder %s20, 0
      %p250 = por %p248, %p249
      %p251 = scmp.ne.s32.totalorder %s243, %s245
      %p252 = scmp.eq.s32.totalorder %s25, 3
      %p253 = por %p251, %p252
      %p254 = scmp.ne.s32.totalorder %s245, %s246
      %p255 = scmp.eq.s32.totalorder %s25, 0
      %p256 = por %p254, %p255
      %p257 = scmp.ne.s32.totalorder %s245, %s246
      %p258 = scmp.eq.s32.totalorder %s26, 3
      %p259 = por %p257, %p258
      %p261 = scmp.ne.s32.totalorder %s246, %s260
      %p262 = scmp.eq.s32.totalorder %s26, 0
      %p263 = por %p261, %p262
      %s265 = sadd.s32 %s264, 1
      %p268 = scmp.eq.s32.totalorder %s20, 3
      %p269 = scmp.ne.s32.totalorder %s264, %s266
      %p270 = scmp.eq.s32.totalorder %s20, 0
      %p271 = por %p269, %p270
      %p272 = scmp.ne.s32.totalorder %s264, %s266
      %p273 = scmp.eq.s32.totalorder %s25, 3
      %p274 = por %p272, %p273
      %p275 = scmp.ne.s32.totalorder %s266, %s267
      %p276 = scmp.eq.s32.totalorder %s25, 0
      %p277 = por %p275, %p276
      %p278 = scmp.ne.s32.totalorder %s266, %s267
      %p279 = scmp.eq.s32.totalorder %s26, 3
      %p280 = por %p278, %p279
      %p282 = scmp.ne.s32.totalorder %s267, %s281
      %p283 = scmp.eq.s32.totalorder %s26, 0
      %p284 = por %p282, %p283
      %p285 = scmp.le.s32.totalorder 1, %s20
      %p286 = scmp.lt.s32.totalorder %s20, 5
      %p287 = pnand %p285, %p286
      %p288 = pneg %p287
      // Predicated region
      $region9: #{tpu_custom_call.1} parent=5 // pred_check
        _
      $region10: #{tpu_custom_call.1} parent=5 // pred_check_branch
        %290 = sbr.rel (%p287) target = $region12
      $region11: #{tpu_custom_call.1} parent=5 // pred_region
        %s291 = ssub.s32 %s20, 1
        // Predicated region
        $region13: #{tpu_custom_call.1} parent=11 // pred_check
          %p292 = pneg %p67
        $region14: #{tpu_custom_call.1} parent=11 // pred_check_branch
          %294 = sbr.rel (%p292) target = $region16
        $region15: #{tpu_custom_call.1} parent=11 // pred_region
          _
        $region16: #{tpu_custom_call.1} parent=11 // pred_fallthru
          _
        // Predicated region
        $region17: #{tpu_custom_call.1} parent=11 // pred_check
          %p295 = pneg %p88
        $region18: #{tpu_custom_call.1} parent=11 // pred_check_branch
          %297 = sbr.rel (%p295) target = $region20
        $region19: #{tpu_custom_call.1} parent=11 // pred_region
          _
        $region20: #{tpu_custom_call.1} parent=11 // pred_fallthru
          _
        // Predicated region
        $region21: #{tpu_custom_call.1} parent=11 // pred_check
          %p298 = pneg %p109
        $region22: #{tpu_custom_call.1} parent=11 // pred_check_branch
          %300 = sbr.rel (%p298) target = $region24
        $region23: #{tpu_custom_call.1} parent=11 // pred_region
          _
        $region24: #{tpu_custom_call.1} parent=11 // pred_fallthru
          _
        // Predicated region
        $region25: #{tpu_custom_call.1} parent=11 // pred_check
          %p301 = pneg %p130
        $region26: #{tpu_custom_call.1} parent=11 // pred_check_branch
          %303 = sbr.rel (%p301) target = $region28
        $region27: #{tpu_custom_call.1} parent=11 // pred_region
          _
        $region28: #{tpu_custom_call.1} parent=11 // pred_fallthru
          _
        // Predicated region
        $region29: #{tpu_custom_call.1} parent=11 // pred_check
          %p304 = pneg %p151
        $region30: #{tpu_custom_call.1} parent=11 // pred_check_branch
          %306 = sbr.rel (%p304) target = $region32
        $region31: #{tpu_custom_call.1} parent=11 // pred_region
          _
        $region32: #{tpu_custom_call.1} parent=11 // pred_fallthru
          _
        // Predicated region
        $region33: #{tpu_custom_call.1} parent=11 // pred_check
          %p307 = pneg %p172
        $region34: #{tpu_custom_call.1} parent=11 // pred_check_branch
          %309 = sbr.rel (%p307) target = $region36
        $region35: #{tpu_custom_call.1} parent=11 // pred_region
          _
        $region36: #{tpu_custom_call.1} parent=11 // pred_fallthru
          _
        // Predicated region
        $region37: #{tpu_custom_call.1} parent=11 // pred_check
          %p310 = pneg %p193
        $region38: #{tpu_custom_call.1} parent=11 // pred_check_branch
          %312 = sbr.rel (%p310) target = $region40
        $region39: #{tpu_custom_call.1} parent=11 // pred_region
          _
        $region40: #{tpu_custom_call.1} parent=11 // pred_fallthru
          _
        // Predicated region
        $region41: #{tpu_custom_call.1} parent=11 // pred_check
          %p313 = pneg %p214
        $region42: #{tpu_custom_call.1} parent=11 // pred_check_branch
          %315 = sbr.rel (%p313) target = $region44
        $region43: #{tpu_custom_call.1} parent=11 // pred_region
          _
        $region44: #{tpu_custom_call.1} parent=11 // pred_fallthru
          _
        // Predicated region
        $region45: #{tpu_custom_call.1} parent=11 // pred_check
          %p316 = pneg %p235
        $region46: #{tpu_custom_call.1} parent=11 // pred_check_branch
          %318 = sbr.rel (%p316) target = $region48
        $region47: #{tpu_custom_call.1} parent=11 // pred_region
          _
        $region48: #{tpu_custom_call.1} parent=11 // pred_fallthru
          _
        // Predicated region
        $region49: #{tpu_custom_call.1} parent=11 // pred_check
          %p319 = pneg %p256
        $region50: #{tpu_custom_call.1} parent=11 // pred_check_branch
          %321 = sbr.rel (%p319) target = $region52
        $region51: #{tpu_custom_call.1} parent=11 // pred_region
          _
        $region52: #{tpu_custom_call.1} parent=11 // pred_fallthru
          _
      $region12: #{tpu_custom_call.1} parent=5 // pred_fallthru
        _
      %p322 = scmp.lt.s32.totalorder %s20, 4
      // Predicated region
      $region53: #{tpu_custom_call.1} parent=5 // pred_check
        %p323 = pneg %p322
      $region54: #{tpu_custom_call.1} parent=5 // pred_check_branch
        %325 = sbr.rel (%p323) target = $region56
      $region55: #{tpu_custom_call.1} parent=5 // pred_region
        // Predicated region
        $region57: #{tpu_custom_call.1} parent=55 // pred_check
          %p326 = pneg %p40
        $region58: #{tpu_custom_call.1} parent=55 // pred_check_branch
          %328 = sbr.rel (%p326) target = $region60
        $region59: #{tpu_custom_call.1} parent=55 // pred_region
          %s329 = smul.u32 2, %s20
          %s330 = ssub.s32 7, %s329
          %p331 = scmp.lt.s32.totalorder %s330, 2
          %s332 = scalar_select %p331, %s330, 2
          %s333 = smul.u32 8, %s332
          %s334 = smul.u32 %s333, 4
          %p335 = scmp.lt.s32.totalorder %s329, 6
          %s336 = scalar_select %p335, %s329, 6
          %s337 = smul.addr %s336, 4
          %s338 = smul.addr %s337, 8
          %s339 = scalar_lea.vmem %s0, %s338
          %s340 = smul.u32 2, %s20
          %s341 = ssub.s32 7, %s340
          %p342 = scmp.lt.s32.totalorder %s341, 2
          %s343 = scalar_select %p342, %s341, 2
          %s344 = smul.u32 8, %s343
          %s345 = smul.u32 %s344, 4
        $region60: #{tpu_custom_call.1} parent=55 // pred_fallthru
          _
      $region56: #{tpu_custom_call.1} parent=5 // pred_fallthru
        _
      %p346 = scmp.le.s32.totalorder 1, %s20
      %p347 = scmp.lt.s32.totalorder %s20, 5
      %p348 = pnand %p346, %p347
      %p349 = pneg %p348
      // Predicated region
      $region61: #{tpu_custom_call.1} parent=5 // pred_check
        _
      $region62: #{tpu_custom_call.1} parent=5 // pred_check_branch
        %351 = sbr.rel (%p348) target = $region64
      $region63: #{tpu_custom_call.1} parent=5 // pred_region
        %s352 = ssub.s32 %s20, 1
        %s353 = smul.u32 2, %s25
        %s354 = ssub.s32 7, %s353
        %p355 = scmp.lt.s32.totalorder %s354, 2
        %s356 = scalar_select %p355, %s354, 2
        %s357 = smul.u32 8, %s356
        %s358 = smul.u32 %s357, 4
        %p359 = scmp.lt.s32.totalorder %s353, 6
        %s360 = scalar_select %p359, %s353, 6
        %s361 = smul.addr %s360, 4
        %s362 = smul.addr %s361, 8
        %s363 = scalar_lea.vmem %s0, %s362
        %p364 = pneg %p46
        %p365 = pneg %p43
        %p366 = pneg %p67
        %p367 = pneg %p64
        %p368 = pneg %p88
        %p369 = pneg %p85
        %p370 = pneg %p109
        %p371 = pneg %p106
        %p372 = pneg %p130
        %p373 = pneg %p127
        %p374 = pneg %p151
        %p375 = pneg %p148
        %p376 = pneg %p172
        %p377 = pneg %p169
        %p378 = pneg %p193
        %p379 = pneg %p190
        %p380 = pneg %p214
        %p381 = pneg %p211
        %p382 = pneg %p235
        %p383 = pneg %p232
        %p384 = pneg %p256
        %p385 = pneg %p253
        %p386 = pneg %p277
        %p387 = pneg %p274
        %s388 = smul.u32 2, %s25
        %s389 = ssub.s32 7, %s388
        %p390 = scmp.lt.s32.totalorder %s389, 2
        %s391 = scalar_select %p390, %s389, 2
        %s392 = smul.u32 8, %s391
        %s393 = smul.u32 %s392, 4
        %p394 = scmp.lt.s32.totalorder %s388, 6
        %s395 = scalar_select %p394, %s388, 6
        %s396 = smul.addr %s395, 4
        %s397 = smul.addr %s396, 8
        %s398 = scalar_lea.vmem %s0, %s397
        %s399 = smul.u32 2, %s25
        %s400 = ssub.s32 7, %s399
        %p401 = scmp.lt.s32.totalorder %s400, 2
        %s402 = scalar_select %p401, %s400, 2
        %s403 = smul.u32 8, %s402
        %s404 = smul.u32 %s403, 4
        %p405 = scmp.eq.s32.totalorder %s25, 0
        // Predicated region
        $region65: #{tpu_custom_call.1} parent=63 // pred_check
          %p406 = pneg %p405
        $region66: #{tpu_custom_call.1} parent=63 // pred_check_branch
          %408 = sbr.rel (%p406) target = $region68
        $region67: #{tpu_custom_call.1} parent=63 // pred_region
          %vm409 = vcmask 523264
          %410 = vst.msk [vmem:[#allocation2] sm:$0xff] %vm409, 0.0
        $region68: #{tpu_custom_call.1} parent=63 // pred_fallthru
          _
        %v411 = vld [vmem:[%s398] sm:$0xff]
        %v412 = vld [vmem:[%s398 + $0x8] sm:$0xff]
        %v413 = vld [vmem:[%s398 + $0x10] sm:$0xff]
        %v414 = vld [vmem:[%s398 + $0x18] sm:$0xff]
        %v415 = vld [vmem:[%s398 + $0x20] sm:$0xff]
        %v416 = vld [vmem:[%s398 + $0x28] sm:$0xff]
        %v417 = vld [vmem:[%s398 + $0x30] sm:$0xff]
        %v418 = vld [vmem:[%s398 + $0x38] sm:$0xff]
        %v419 = vpack.c.bf16 %v415, %v411
        %v420 = vpack.c.bf16 %v416, %v412
        %v421 = vpack.c.bf16 %v417, %v413
        %v422 = vpack.c.bf16 %v418, %v414
        %v423 = vld [vmem:[%s1] sm:$0xf]
        %v424 = vld [vmem:[%s1 + $0x4] sm:$0xf]
        %v425 = vld [vmem:[%s1 + $0x8] sm:$0xf]
        %v426 = vld [vmem:[%s1 + $0xc] sm:$0xf]
        %v427 = vld [vmem:[%s1 + $0x10] sm:$0xf]
        %v428 = vld [vmem:[%s1 + $0x14] sm:$0xf]
        %v429 = vld [vmem:[%s1 + $0x18] sm:$0xf]
        %v430 = vld [vmem:[%s1 + $0x1c] sm:$0xf]
        %v431 = vld [vmem:[%s1 + $0x20] sm:$0xf]
        %v432 = vld [vmem:[%s1 + $0x24] sm:$0xf]
        %v433 = vld [vmem:[%s1 + $0x28] sm:$0xf]
        %v434 = vld [vmem:[%s1 + $0x2c] sm:$0xf]
        %v435 = vld [vmem:[%s1 + $0x30] sm:$0xf]
        %v436 = vld [vmem:[%s1 + $0x34] sm:$0xf]
        %v437 = vld [vmem:[%s1 + $0x38] sm:$0xf]
        %v438 = vld [vmem:[%s1 + $0x3c] sm:$0xf]
        %v439 = vld [vmem:[%s1 + $0x40] sm:$0xf]
        %v440 = vld [vmem:[%s1 + $0x44] sm:$0xf]
        %v441 = vld [vmem:[%s1 + $0x48] sm:$0xf]
        %v442 = vld [vmem:[%s1 + $0x4c] sm:$0xf]
        %v443 = vld [vmem:[%s1 + $0x50] sm:$0xf]
        %v444 = vld [vmem:[%s1 + $0x54] sm:$0xf]
        %v445 = vld [vmem:[%s1 + $0x58] sm:$0xf]
        %v446 = vld [vmem:[%s1 + $0x5c] sm:$0xf]
        %v447 = vld [vmem:[%s1 + $0x60] sm:$0xf]
        %v448 = vld [vmem:[%s1 + $0x64] sm:$0xf]
        %v449 = vld [vmem:[%s1 + $0x68] sm:$0xf]
        %v450 = vld [vmem:[%s1 + $0x6c] sm:$0xf]
        %v451 = vld [vmem:[%s1 + $0x70] sm:$0xf]
        %v452 = vld [vmem:[%s1 + $0x74] sm:$0xf]
        %v453 = vld [vmem:[%s1 + $0x78] sm:$0xf]
        %v454 = vld [vmem:[%s1 + $0x7c] sm:$0xf]
        %v455 = vld [vmem:[%s1 + $0x80] sm:$0xf]
        %v456 = vld [vmem:[%s1 + $0x84] sm:$0xf]
        %v457 = vld [vmem:[%s1 + $0x88] sm:$0xf]
        %v458 = vld [vmem:[%s1 + $0x8c] sm:$0xf]
        %v459 = vld [vmem:[%s1 + $0x90] sm:$0xf]
        %v460 = vld [vmem:[%s1 + $0x94] sm:$0xf]
        %v461 = vld [vmem:[%s1 + $0x98] sm:$0xf]
        %v462 = vld [vmem:[%s1 + $0x9c] sm:$0xf]
        %v463 = vld [vmem:[%s1 + $0xa0] sm:$0xf]
        %v464 = vld [vmem:[%s1 + $0xa4] sm:$0xf]
        %v465 = vld [vmem:[%s1 + $0xa8] sm:$0xf]
        %v466 = vld [vmem:[%s1 + $0xac] sm:$0xf]
        %v467 = vld [vmem:[%s1 + $0xb0] sm:$0xf]
        %v468 = vld [vmem:[%s1 + $0xb4] sm:$0xf]
        %v469 = vld [vmem:[%s1 + $0xb8] sm:$0xf]
        %v470 = vld [vmem:[%s1 + $0xbc] sm:$0xf]
        %v471 = vld [vmem:[%s1 + $0xc0] sm:$0xf]
        %v472 = vld [vmem:[%s1 + $0xc4] sm:$0xf]
        %v473 = vld [vmem:[%s1 + $0xc8] sm:$0xf]
        %v474 = vld [vmem:[%s1 + $0xcc] sm:$0xf]
        %v475 = vld [vmem:[%s1 + $0xd0] sm:$0xf]
        %v476 = vld [vmem:[%s1 + $0xd4] sm:$0xf]
        %v477 = vld [vmem:[%s1 + $0xd8] sm:$0xf]
        %v478 = vld [vmem:[%s1 + $0xdc] sm:$0xf]
        %v479 = vld [vmem:[%s1 + $0xe0] sm:$0xf]
        %v480 = vld [vmem:[%s1 + $0xe4] sm:$0xf]
        %v481 = vld [vmem:[%s1 + $0xe8] sm:$0xf]
        %v482 = vld [vmem:[%s1 + $0xec] sm:$0xf]
        %v483 = vld [vmem:[%s1 + $0xf0] sm:$0xf]
        %v484 = vld [vmem:[%s1 + $0xf4] sm:$0xf]
        %v485 = vld [vmem:[%s1 + $0xf8] sm:$0xf]
        %v486 = vld [vmem:[%s1 + $0xfc] sm:$0xf]
        %v487 = vld [vmem:[%s2] sm:$0x1]
        %v489 = vperm.slane %v487, 0
        %v555 = vunpack.c.l.b16 %v423
        %v556 = vunpack.c.l.b16 %v424
        %v557 = vunpack.c.l.b16 %v425
        %v558 = vunpack.c.l.b16 %v426
        %v559 = vunpack.c.l.b16 %v427
        %v560 = vunpack.c.l.b16 %v428
        %v561 = vunpack.c.l.b16 %v429
        %v562 = vunpack.c.l.b16 %v430
        %v563 = vunpack.c.l.b16 %v431
        %v564 = vunpack.c.l.b16 %v432
        %v565 = vunpack.c.l.b16 %v433
        %v566 = vunpack.c.l.b16 %v434
        %v567 = vunpack.c.l.b16 %v435
        %v568 = vunpack.c.l.b16 %v436
        %v569 = vunpack.c.l.b16 %v437
        %v570 = vunpack.c.l.b16 %v438
        %v571 = vunpack.c.l.b16 %v439
        %v572 = vunpack.c.l.b16 %v440
        %v573 = vunpack.c.l.b16 %v441
        %v574 = vunpack.c.l.b16 %v442
        %v575 = vunpack.c.l.b16 %v443
        %v576 = vunpack.c.l.b16 %v444
        %v577 = vunpack.c.l.b16 %v445
        %v578 = vunpack.c.l.b16 %v446
        %v579 = vunpack.c.l.b16 %v447
        %v580 = vunpack.c.l.b16 %v448
        %v581 = vunpack.c.l.b16 %v449
        %v582 = vunpack.c.l.b16 %v450
        %v583 = vunpack.c.l.b16 %v451
        %v584 = vunpack.c.l.b16 %v452
        %v585 = vunpack.c.l.b16 %v453
        %v586 = vunpack.c.l.b16 %v454
        %v587 = vunpack.c.l.b16 %v455
        %v588 = vunpack.c.l.b16 %v456
        %v589 = vunpack.c.l.b16 %v457
        %v590 = vunpack.c.l.b16 %v458
        %v591 = vunpack.c.l.b16 %v459
        %v592 = vunpack.c.l.b16 %v460
        %v593 = vunpack.c.l.b16 %v461
        %v594 = vunpack.c.l.b16 %v462
        %v595 = vunpack.c.l.b16 %v463
        %v596 = vunpack.c.l.b16 %v464
        %v597 = vunpack.c.l.b16 %v465
        %v598 = vunpack.c.l.b16 %v466
        %v599 = vunpack.c.l.b16 %v467
        %v600 = vunpack.c.l.b16 %v468
        %v601 = vunpack.c.l.b16 %v469
        %v602 = vunpack.c.l.b16 %v470
        %v603 = vunpack.c.l.b16 %v471
        %v604 = vunpack.c.l.b16 %v472
        %v605 = vunpack.c.l.b16 %v473
        %v606 = vunpack.c.l.b16 %v474
        %v607 = vunpack.c.l.b16 %v475
        %v608 = vunpack.c.l.b16 %v476
        %v609 = vunpack.c.l.b16 %v477
        %v610 = vunpack.c.l.b16 %v478
        %v611 = vunpack.c.l.b16 %v479
        %v612 = vunpack.c.l.b16 %v480
        %v613 = vunpack.c.l.b16 %v481
        %v614 = vunpack.c.l.b16 %v482
        %v615 = vunpack.c.l.b16 %v483
        %v616 = vunpack.c.l.b16 %v484
        %v617 = vunpack.c.l.b16 %v485
        %v618 = vunpack.c.l.b16 %v486
        %v619 = vpack.c.b16 %v556, %v555
        %v620 = vpack.c.b16 %v558, %v557
        %v621 = vpack.c.b16 %v560, %v559
        %v622 = vpack.c.b16 %v562, %v561
        %v623 = vpack.c.b16 %v564, %v563
        %v624 = vpack.c.b16 %v566, %v565
        %v625 = vpack.c.b16 %v568, %v567
        %v626 = vpack.c.b16 %v570, %v569
        %v627 = vpack.c.b16 %v572, %v571
        %v628 = vpack.c.b16 %v574, %v573
        %v629 = vpack.c.b16 %v576, %v575
        %v630 = vpack.c.b16 %v578, %v577
        %v631 = vpack.c.b16 %v580, %v579
        %v632 = vpack.c.b16 %v582, %v581
        %v633 = vpack.c.b16 %v584, %v583
        %v634 = vpack.c.b16 %v586, %v585
        %v635 = vpack.c.b16 %v588, %v587
        %v636 = vpack.c.b16 %v590, %v589
        %v637 = vpack.c.b16 %v592, %v591
        %v638 = vpack.c.b16 %v594, %v593
        %v639 = vpack.c.b16 %v596, %v595
        %v640 = vpack.c.b16 %v598, %v597
        %v641 = vpack.c.b16 %v600, %v599
        %v642 = vpack.c.b16 %v602, %v601
        %v643 = vpack.c.b16 %v604, %v603
        %v644 = vpack.c.b16 %v606, %v605
        %v645 = vpack.c.b16 %v608, %v607
        %v646 = vpack.c.b16 %v610, %v609
        %v647 = vpack.c.b16 %v612, %v611
        %v648 = vpack.c.b16 %v614, %v613
        %v649 = vpack.c.b16 %v616, %v615
        %v650 = vpack.c.b16 %v618, %v617
        %683 = vmatpush.bf16.msra.mxu0 %v626
        %684 = vmatpush.bf16.msra.mxu0 %v625
        %685 = vmatpush.bf16.msra.mxu0 %v624
        %686 = vmatpush.bf16.msra.mxu0 %v623
        %687 = vmatpush.bf16.msra.mxu0 %v622
        %688 = vmatpush.bf16.msra.mxu0 %v621
        %689 = vmatpush.bf16.msra.mxu0 %v620
        %690 = vmatpush.bf16.msra.mxu0 %v619
        %691 = vmatmul.bf16.gmra.mxu0 %v419
        %v692 = vpop.f32.mrf.mxu0
        %v693 = vadd.f32 %v489, %v692
        %v694 = vpop.f32.mrf.mxu0
        %v695 = vadd.f32 %v489, %v694
        %696 = vdwg.mxu0
        %697 = vmatpush.bf16.msra.mxu0 %v634
        %698 = vmatpush.bf16.msra.mxu0 %v633
        %699 = vmatpush.bf16.msra.mxu0 %v632
        %700 = vmatpush.bf16.msra.mxu0 %v631
        %701 = vmatpush.bf16.msra.mxu0 %v630
        %702 = vmatpush.bf16.msra.mxu0 %v629
        %703 = vmatpush.bf16.msra.mxu0 %v628
        %704 = vmatpush.bf16.msra.mxu0 %v627
        %705 = vmatmul.bf16.gmra.mxu0 %v420
        %v706 = vpop.f32.mrf.mxu0
        %v707 = vadd.f32 %v693, %v706
        %v708 = vpop.f32.mrf.mxu0
        %v709 = vadd.f32 %v695, %v708
        %710 = vdwg.mxu0
        %711 = vmatpush.bf16.msra.mxu0 %v642
        %712 = vmatpush.bf16.msra.mxu0 %v641
        %713 = vmatpush.bf16.msra.mxu0 %v640
        %714 = vmatpush.bf16.msra.mxu0 %v639
        %715 = vmatpush.bf16.msra.mxu0 %v638
        %716 = vmatpush.bf16.msra.mxu0 %v637
        %717 = vmatpush.bf16.msra.mxu0 %v636
        %718 = vmatpush.bf16.msra.mxu0 %v635
        %719 = vmatmul.bf16.gmra.mxu0 %v421
        %v720 = vpop.f32.mrf.mxu0
        %v721 = vadd.f32 %v707, %v720
        %v722 = vpop.f32.mrf.mxu0
        %v723 = vadd.f32 %v709, %v722
        %724 = vdwg.mxu0
        %725 = vmatpush.bf16.msra.mxu0 %v650
        %726 = vmatpush.bf16.msra.mxu0 %v649
        %727 = vmatpush.bf16.msra.mxu0 %v648
        %728 = vmatpush.bf16.msra.mxu0 %v647
        %729 = vmatpush.bf16.msra.mxu0 %v646
        %730 = vmatpush.bf16.msra.mxu0 %v645
        %731 = vmatpush.bf16.msra.mxu0 %v644
        %732 = vmatpush.bf16.msra.mxu0 %v643
        %733 = vmatmul.bf16.gmra.mxu0 %v422
        %v734 = vpop.f32.mrf.mxu0
        %v735 = vadd.f32 %v721, %v734
        %v736 = vpop.f32.mrf.mxu0
        %v737 = vadd.f32 %v723, %v736
        %738 = vdwg.mxu0
        %v739 = vmax.f32 %v735, 0.0
        %v740 = vmax.f32 %v737, 0.0
        %s741 = smul.u32 %s25, 16
        %v742 = vlaneseq
        %v743 = vshrl.u32 %v742, 7
        %v744 = vadd.s32 %v743, 8
        %v745 = vstv %s741
        %v746 = vadd.s32 %v745, %v743
        %v747 = vadd.s32 %v745, %v744
        %vm748 = vcmp.lt.s32.totalorder %v746, 50
        %vm749 = vcmp.lt.s32.totalorder %v747, 50
        %v750 = vsel %vm748, 1, 0
        %v751 = vsel %vm749, 1, 0
        %vm752 = vcmp.eq.s32.totalorder %v750, 1
        %vm753 = vcmp.eq.s32.totalorder %v751, 1
        %v754 = vsel %vm752, %v739, 0.0
        %v755 = vsel %vm753, %v740, 0.0
        %v756 = vld [vmem:[%s3] sm:$0xff]
        %v757 = vld [vmem:[%s3 + $0x8] sm:$0xff]
        %v758 = vld [vmem:[%s3 + $0x10] sm:$0xff]
        %v759 = vld [vmem:[%s3 + $0x18] sm:$0xff]
        %v760 = vld [vmem:[%s3 + $0x20] sm:$0xff]
        %v761 = vld [vmem:[%s3 + $0x28] sm:$0xff]
        %v762 = vld [vmem:[%s3 + $0x30] sm:$0xff]
        %v763 = vld [vmem:[%s3 + $0x38] sm:$0xff]
        %v764 = vld [vmem:[%s4] sm:$0x1]
        %v766 = vperm.slane %v764, 0
        %vm768 = vcmask 523264
        %v770 = vsel %vm768, %v754, 0
        %v773 = vsel %vm768, %v755, 0
        %775 = vmatpush.msra.mxu0 0.0
        %776 = vmatpush.msra.mxu0 0.0
        %777 = vmatpush.msra.mxu0 0.0
        %778 = vmatpush.msra.mxu0 0.0
        %779 = vmatpush.msra.mxu0 0.0
        %780 = vmatpush.msra.mxu0 0.0
        %781 = vmatpush.msra.mxu0 0.0
        %782 = vmatpush.msra.mxu0 0.0
        %783 = vmatpush.msra.mxu0 %v763
        %784 = vmatpush.msra.mxu0 %v762
        %785 = vmatpush.msra.mxu0 %v761
        %786 = vmatpush.msra.mxu0 %v760
        %787 = vmatpush.msra.mxu0 %v759
        %788 = vmatpush.msra.mxu0 %v758
        %789 = vmatpush.msra.mxu0 %v757
        %790 = vmatpush.msra.mxu0 %v756
        %791 = vmatmul.f32.gmra.mxu0 %v770
        %v792 = vpop.f32.mrf.mxu0
        %v793 = vadd.f32 %v766, %v792
        %794 = vmatmul.f32.gmra.mxu0 %v773
        %v795 = vpop.f32.mrf.mxu0
        %v796 = vadd.f32 %v766, %v795
        %797 = vdwg.mxu0
        %v798 = vtanh.pop %v793
        %v799 = vtanh.pop %v796
        %v800 = vld [vmem:[%s5] sm:$0x1]
        %v802 = vperm.slane %v800, 0
        %v804 = vmul.f32 %v798, %v802
        %v805 = vmul.f32 %v799, %v802
        %vm806 = vcmask 261120
        %v807 = vsel %vm806, %v804, 0.0
        %808 = vadd.xlane.f32.xlu0 %v807
        %v809 = vpop.xlane.xlu0 %808
        %v810 = vsel %vm806, %v805, 0.0
        %811 = vadd.xlane.f32.xlu0 %v810
        %v812 = vpop.xlane.xlu0 %811
        %s813 = sld [smem:[#allocation3]]
        %v814 = vstv %s813
        %v815 = vadd.f32 %v809, %v814
        %v816 = vadd.f32 %v812, %v814
        %v817 = vmul.f32 %v815, %v754
        %v818 = vmul.f32 %v816, %v755
        %v819 = vld [vmem:[#allocation2] sm:$0xff]
        %v820 = vsel %vm768, %v817, 0.0
        %v821 = vsel %vm768, %v818, 0.0
        %v822 = vadd.f32 %v820, %v821
        %v823 = vadd.f32 %v819, %v822
        %824 = vst.msk [vmem:[#allocation2] sm:$0xff] %vm768, %v823
        %p825 = scmp.eq.s32.totalorder %s25, 3
        // Predicated region
        $region69: #{tpu_custom_call.1} parent=63 // pred_check
          %p826 = pneg %p825
        $region70: #{tpu_custom_call.1} parent=63 // pred_check_branch
          %828 = sbr.rel (%p826) target = $region72
        $region71: #{tpu_custom_call.1} parent=63 // pred_region
          %v829 = vld [vmem:[#allocation2] sm:$0xff]
          %v830 = vsel %vm768, %v829, 0.0
          %v831 = vrot.slane %v830, 4
          %v832 = vadd.f32 %v830, %v831
          %v833 = vrot.slane %v832, 2
          %v834 = vadd.f32 %v832, %v833
          %v835 = vrot.slane %v834, 1
          %v836 = vadd.f32 %v834, %v835
          %v837 = vsel %vm768, %v836, 0.0
          %838 = vadd.xlane.f32.xlu0 %v837
          %v839 = vpop.xlane.xlu0 %838
          %v840 = vrcp.pop 64.0
          %v841 = vmul.f32 64.0, %v840
          %v842 = vsub.f32 1.0, %v841
          %v843 = vmul.f32 %v840, %v842
          %v844 = vadd.f32 %v840, %v843
          %vm845 = vweird.f32 %v840
          %v846 = vsel %vm845, %v840, %v844
          %v847 = vmul.f32 %v839, %v846
          %v848 = vsub.f32 %v836, %v847
          %v849 = vmul.f32 %v848, %v848
          %v850 = vsel %vm768, %v849, 0.0
          %851 = vadd.xlane.f32.xlu0 %v850
          %v852 = vpop.xlane.xlu0 %851
          %v853 = vmul.f32 %v852, %v846
          %v854 = vadd.f32 %v853, 1e-06
          %v855 = vrsqrt.pop %v854
          %v856 = vmul.f32 %v855, %v854
          %v857 = vmul.f32 %v856, %v855
          %v858 = vmul.f32 0.5, %v857
          %v859 = vsub.f32 1.5, %v858
          %v860 = vmul.f32 %v855, %v859
          %vm861 = vweird.f32 %v854
          %vm862 = vweird.f32 %v855
          %vm863 = vmor %vm861, %vm862
          %v864 = vsel %vm863, %v855, %v860
          %v865 = vmul.f32 %v848, %v864
          %v866 = vld [vmem:[%s7] sm:$0x1]
          %v867 = vmul.f32 %v865, %v866
          %v868 = vld [vmem:[%s8] sm:$0x1]
          %v869 = vadd.f32 %v867, %v868
          %v870 = vld [vmem:[%s9] sm:$0x1]
          %v871 = vmul.f32 %v869, %v870
          %vm872 = vcmask 516096
          %v873 = vsel %vm872, %v871, 0.0
          %874 = vadd.xlane.f32.xlu0 %v873
          %v875 = vpop.xlane.xlu0 %874
          %s876 = sld [smem:[#allocation4]]
          %v877 = vstv %s876
          %v878 = vadd.f32 %v875, %v877
          %v879 = vxor.u32 %v878, 2147483648
          %v880 = vmul.f32 %v879, 1.442695
          %v881 = vpow.pop %v880
          %v882 = vadd.f32 %v881, 1.0
          %v883 = vrcp.pop %v882
          %v884 = vmul.f32 %v882, %v883
          %v885 = vsub.f32 1.0, %v884
          %v886 = vmul.f32 %v883, %v885
          %v887 = vadd.f32 %v883, %v886
          %vm888 = vweird.f32 %v882
          %vm889 = vweird.f32 %v883
          %vm890 = vmor %vm888, %vm889
          %v891 = vsel %vm890, %v883, %v887
          %v892 = vand.u32 2147483647, %v882
          %vm893 = vcmp.eq.f32.partialorder %v892, 8.507059e+37
          %v894 = vand.u32 %v882, 2147483648
          %v895 = vor.u32 1.1754944e-38, %v894
          %v896 = vsel %vm893, %v895, %v891
          %v897 = vmul.f32 1.0, %v896
          %vm898 = vcmask 0
          %899 = vst.msk [vmem:[#allocation5] sm:$0x1] %vm898, %v897
        $region72: #{tpu_custom_call.1} parent=63 // pred_fallthru
          _
        // Predicated region
        $region73: #{tpu_custom_call.1} parent=63 // pred_check
          %p900 = pneg %p274
        $region74: #{tpu_custom_call.1} parent=63 // pred_check_branch
          %902 = sbr.rel (%p900) target = $region76
        $region75: #{tpu_custom_call.1} parent=63 // pred_region
          %904 = vsyncadd [#allocation6], 0
          %s906 = sshll.u32 [#allocation5], 4
          %s907 = int_to_ptr.vmem [resolvable:$true] %s906
          %s908 = sshll.u32 %s11, 4
          %s909 = int_to_ptr.hbm [resolvable:$true] %s908
          %911 = dma.vmem_to_hbm [thread:$0]  %s907, 16, %s909, [#allocation6]
        $region76: #{tpu_custom_call.1} parent=63 // pred_fallthru
          _
        // Predicated region
        $region77: #{tpu_custom_call.1} parent=63 // pred_check
          %p912 = pneg %p274
        $region78: #{tpu_custom_call.1} parent=63 // pred_check_branch
          %914 = sbr.rel (%p912) target = $region80
        $region79: #{tpu_custom_call.1} parent=63 // pred_region
          %916 = dma.done [#allocation6], 16
        $region80: #{tpu_custom_call.1} parent=63 // pred_fallthru
          _
      $region64: #{tpu_custom_call.1} parent=5 // pred_fallthru
        _
      %p917 = scmp.le.s32.totalorder 2, %s20
      // Predicated region
      $region81: #{tpu_custom_call.1} parent=5 // pred_check
        %p918 = pneg %p917
      $region82: #{tpu_custom_call.1} parent=5 // pred_check_branch
        %920 = sbr.rel (%p918) target = $region84
      $region83: #{tpu_custom_call.1} parent=5 // pred_region
        %s921 = ssub.s32 %s20, 2
      $region84: #{tpu_custom_call.1} parent=5 // pred_fallthru
        _
    $region6: #{tpu_custom_call.1} parent=1 // loop_footer
      %s24 = sadd.s32 1, %s20
    $region7: #{tpu_custom_call.1} parent=1 // loop_footer_branch
      %19 = sbr.rel target = $region3
    $region8: #{tpu_custom_call.1} parent=1 // loop_exit
      _
    %922 = vsyncpa [#allocation6], 1
    %s923 = scalar_lea.sflag [#allocation6], 1
    %924 = vsyncpa %s923, 1

</llo_original>
